<compile_context>
chip_gen: v7x
topology: tpu7x:2x2x1
jax: 0.10.0
libtpu: 0.0.40
codegen_flags: <defaults>
</compile_context>

<pallas_src>
import functools

import jax
import jax.numpy as jnp
from jax.experimental import pallas as pl
from jax.experimental.pallas import tpu as pltpu

LANE = 128  # TPU vreg lane width


# ----------------------------- Pallas kernels ------------------------------

def _mlp_mean(obs, w1, b1, w2, b2, w3, b3):
    h = jnp.tanh(jnp.dot(obs, w1, preferred_element_type=jnp.float32) + b1)
    h = jnp.tanh(jnp.dot(h, w2, preferred_element_type=jnp.float32) + b2)
    return jnp.dot(h, w3, preferred_element_type=jnp.float32) + b3


def _actor_mean_kernel(obs_ref, w1_ref, b1_ref, w2_ref, b2_ref, w3_ref, b3_ref,
                       out_ref):
    # Deterministic path: action == mean, so only mean is materialized.
    out_ref[...] = _mlp_mean(obs_ref[...], w1_ref[...], b1_ref[...],
                             w2_ref[...], b2_ref[...], w3_ref[...], b3_ref[...])


def _actor_sample_kernel(obs_ref, w1_ref, b1_ref, w2_ref, b2_ref, w3_ref,
                         b3_ref, logstd_ref, noise_ref, out_ref, *, act_pad):
    mean = _mlp_mean(obs_ref[...], w1_ref[...], b1_ref[...],
                     w2_ref[...], b2_ref[...], w3_ref[...], b3_ref[...])
    std = jnp.exp(logstd_ref[...])                  # (1, act_pad), broadcasts
    act = mean + noise_ref[...] * std               # reparameterized sample
    # Two aligned 128-lane-dense stores into one (TB, 2*act_pad) output slab.
    out_ref[:, :act_pad] = mean
    out_ref[:, act_pad:] = act


# ------------------------------- wrapper ------------------------------------

def mlp_actor_forward(obs, params, noise=None, *, deterministic=False,
                      batch_tile=512):
    """Runs the MLPActorContinuous forward pass as one batch-tiled Pallas call.

    Returns (action, mean)."""
    w1, b1, w2, b2, w3, b3, log_std = params
    B, obs_dim = obs.shape
    h1 = w1.shape[1]
    h2 = w2.shape[1]
    act_dim = w3.shape[1]
    act_pad = ((act_dim + LANE - 1) // LANE) * LANE  # lane-dense action width

    # Batch tile: multiple of 8, up to `batch_tile` rows; pad B up to a
    # whole number of tiles (padded rows/columns are zero and sliced off).
    tb = batch_tile if B >= batch_tile else ((B + 7) // 8) * 8
    b_pad = ((B + tb - 1) // tb) * tb
    grid = (b_pad // tb,)

    f32 = jnp.float32

    def pad_to(x, rows, cols):
        x = x.astype(f32)
        return jnp.pad(x, ((0, rows - x.shape[0]), (0, cols - x.shape[1])))

    obs_p = pad_to(obs, b_pad, obs_dim)
    w3_p = pad_to(w3, h2, act_pad)
    b3_p = pad_to(b3, 1, act_pad)

    # Constant-index blocks: weights stay resident in VMEM across grid steps.
    const = lambda shape: pl.BlockSpec(shape, lambda i: (0, 0))
    # Streaming blocks: batch-tiled, double-buffered by the Pallas pipeline.
    stream = lambda feat: pl.BlockSpec((tb, feat), lambda i: (i, 0))

    common_inputs = (obs_p, w1.astype(f32), b1.astype(f32), w2.astype(f32),
                     b2.astype(f32), w3_p, b3_p)
    common_specs = [stream(obs_dim), const(w1.shape), const(b1.shape),
                    const(w2.shape), const(b2.shape), const((h2, act_pad)),
                    const((1, act_pad))]

    flops = 2 * b_pad * (obs_dim * h1 + h1 * h2 + h2 * act_pad)
    trans = b_pad * (h1 + h2)

    if deterministic:
        # No noise / log_std DMA, no duplicate action writeback.
        inputs = common_inputs
        in_specs = common_specs
        kernel = _actor_mean_kernel
        out_cols = act_pad
    else:
        if noise is None:
            raise ValueError("noise is required when deterministic=False")
        log_std_p = pad_to(log_std.reshape(1, act_dim), 1, act_pad)
        noise_p = pad_to(noise, b_pad, act_pad)
        inputs = common_inputs + (log_std_p, noise_p)
        in_specs = common_specs + [const((1, act_pad)), stream(act_pad)]
        kernel = functools.partial(_actor_sample_kernel, act_pad=act_pad)
        out_cols = 2 * act_pad
        trans += b_pad * act_pad  # exp(log_std) broadcast work (upper bound)

    bytes_accessed = sum(int(x.size) * 4 for x in inputs) + b_pad * out_cols * 4

    out = pl.pallas_call(
        kernel,
        out_shape=jax.ShapeDtypeStruct((b_pad, out_cols), f32),
        grid=grid,
        in_specs=in_specs,
        out_specs=stream(out_cols),
        compiler_params=pltpu.CompilerParams(
            # Batch tiles are independent: shard across TCs on v7x megacore.
            dimension_semantics=("parallel",),
            # Tiles are tiny (< 2 MiB double-buffered); 32 MiB is safe on
            # v5e/v6e (128 MiB physical) and v7x (64 MiB physical).
            vmem_limit_bytes=32 * 1024 * 1024,
        ),
        cost_estimate=pl.CostEstimate(
            flops=flops, transcendentals=trans, bytes_accessed=bytes_accessed),
    )(*inputs)

    if deterministic:
        mean = out[:B, :act_dim]
        return mean, mean                       # action aliases mean
    mean = out[:B, :act_dim]
    act = out[:B, act_pad:act_pad + act_dim]
    return act, mean


# --------------------------- parameter creation ----------------------------

def _orthogonal(key, out_dim, in_dim, gain):
    """Deterministic orthogonal init matching torch.nn.init.orthogonal_ semantics."""
    rows, cols = out_dim, in_dim
    flat = jax.random.normal(key, (rows, cols), jnp.float32)
    transpose = rows < cols
    if transpose:
        flat = flat.T
    q, r = jnp.linalg.qr(flat)
    q = q * jnp.sign(jnp.diagonal(r))[None, :]
    if transpose:
        q = q.T
    return gain * q  # shape (out_dim, in_dim), torch convention


def make_params(key, obs_dim, hidden_sizes, act_dim, log_std_init):
    k1, k2, k3 = jax.random.split(key, 3)
    h1, h2 = hidden_sizes
    gain_h = jnp.sqrt(2.0)
    # Store weights as (in, out) for the kernel's x @ W convention.
    w1 = _orthogonal(k1, h1, obs_dim, gain_h).T
    w2 = _orthogonal(k2, h2, h1, gain_h).T
    w3 = _orthogonal(k3, act_dim, h2, 0.01).T
    b1 = jnp.zeros((1, h1), jnp.float32)
    b2 = jnp.zeros((1, h2), jnp.float32)
    b3 = jnp.zeros((1, act_dim), jnp.float32)
    if len(log_std_init) != act_dim:
        log_std_init = [log_std_init[0]] * act_dim
    log_std = jnp.asarray(log_std_init, jnp.float32).reshape(1, act_dim)
    return (w1, b1, w2, b2, w3, b3, log_std)


# --------------------------------- main ------------------------------------

if __name__ == "__main__":
    # Small shapes consistent with the module: obs_dim=16, hidden=[32, 32], act_dim=4.
    B, OBS_DIM, HIDDEN, ACT_DIM = 2, 16, [32, 32], 4

    key = jax.random.PRNGKey(0)
    k_param, k_obs, k_noise = jax.random.split(key, 3)

    params = make_params(k_param, OBS_DIM, HIDDEN, ACT_DIM, log_std_init=[-0.5])
    obs = jax.random.normal(k_obs, (B, OBS_DIM), jnp.float32)
    # Reparameterized standard-normal noise for pi.sample() (deterministic seed).
    noise = jax.random.normal(k_noise, (B, ACT_DIM), jnp.float32)

    # Stochastic forward (deterministic=False): a = mean + exp(log_std) * eps
    act_sample, mean = mlp_actor_forward(obs, params, noise, deterministic=False)
    # Greedy forward (deterministic=True): a = mean  (noise not DMA'd at all)
    act_greedy, _ = mlp_actor_forward(obs, params, deterministic=True)

    jax.block_until_ready((act_sample, act_greedy, mean))

    # Light sanity check against a pure-JAX reference of the same math.
    w1, b1, w2, b2, w3, b3, log_std = params
    h = jnp.tanh(obs @ w1 + b1)
    h = jnp.tanh(h @ w2 + b2)
    ref_mean = h @ w3 + b3
    ref_act = ref_mean + noise * jnp.exp(log_std)
    assert jnp.allclose(mean, ref_mean, atol=1e-5)
    assert jnp.allclose(act_sample, ref_act, atol=1e-5)
    assert jnp.allclose(act_greedy, ref_mean, atol=1e-5)

    print("KERNEL_OK")
</pallas_src>

<mosaic_0001>
module attributes {stable_mosaic.version = 11 : i64} {
  func.func @_actor_sample_kernel(%arg0: i32, %arg1: memref<8x16xf32, #tpu.memory_space<vmem>>, %arg2: memref<16x32xf32, #tpu.memory_space<vmem>>, %arg3: memref<1x32xf32, #tpu.memory_space<vmem>>, %arg4: memref<32x32xf32, #tpu.memory_space<vmem>>, %arg5: memref<1x32xf32, #tpu.memory_space<vmem>>, %arg6: memref<32x128xf32, #tpu.memory_space<vmem>>, %arg7: memref<1x128xf32, #tpu.memory_space<vmem>>, %arg8: memref<1x128xf32, #tpu.memory_space<vmem>>, %arg9: memref<8x128xf32, #tpu.memory_space<vmem>>, %arg10: memref<8x256xf32, #tpu.memory_space<vmem>>) attributes {dimension_semantics = [#tpu.dimension_semantics<parallel>], iteration_bounds = array<i64: 1>, scalar_prefetch = 0 : i64, scratch_operands = 0 : i64, tpu.core_type = #tpu.core_type<tc>, window_params = [{transform_indices = @transform_0, window_bounds = array<i64: 8, 16>}, {pipeline_mode = #tpu.pipeline_mode<synchronous>, transform_indices = @transform_1, window_bounds = array<i64: 16, 32>}, {pipeline_mode = #tpu.pipeline_mode<synchronous>, transform_indices = @transform_2, window_bounds = array<i64: 1, 32>}, {pipeline_mode = #tpu.pipeline_mode<synchronous>, transform_indices = @transform_3, window_bounds = array<i64: 32, 32>}, {pipeline_mode = #tpu.pipeline_mode<synchronous>, transform_indices = @transform_4, window_bounds = array<i64: 1, 32>}, {pipeline_mode = #tpu.pipeline_mode<synchronous>, transform_indices = @transform_5, window_bounds = array<i64: 32, 128>}, {pipeline_mode = #tpu.pipeline_mode<synchronous>, transform_indices = @transform_6, window_bounds = array<i64: 1, 128>}, {pipeline_mode = #tpu.pipeline_mode<synchronous>, transform_indices = @transform_7, window_bounds = array<i64: 1, 128>}, {transform_indices = @transform_8, window_bounds = array<i64: 8, 128>}, {transform_indices = @transform_9, window_bounds = array<i64: 8, 256>}]} {
    %c0 = arith.constant 0 : index
    %c0_0 = arith.constant 0 : index
    %0 = vector.load %arg1[%c0, %c0_0] : memref<8x16xf32, #tpu.memory_space<vmem>>, vector<8x16xf32>
    %c0_1 = arith.constant 0 : index
    %c0_2 = arith.constant 0 : index
    %1 = vector.load %arg2[%c0_1, %c0_2] : memref<16x32xf32, #tpu.memory_space<vmem>>, vector<16x32xf32>
    %c0_3 = arith.constant 0 : index
    %c0_4 = arith.constant 0 : index
    %2 = vector.load %arg3[%c0_3, %c0_4] : memref<1x32xf32, #tpu.memory_space<vmem>>, vector<1x32xf32>
    %c0_5 = arith.constant 0 : index
    %c0_6 = arith.constant 0 : index
    %3 = vector.load %arg4[%c0_5, %c0_6] : memref<32x32xf32, #tpu.memory_space<vmem>>, vector<32x32xf32>
    %c0_7 = arith.constant 0 : index
    %c0_8 = arith.constant 0 : index
    %4 = vector.load %arg5[%c0_7, %c0_8] : memref<1x32xf32, #tpu.memory_space<vmem>>, vector<1x32xf32>
    %c0_9 = arith.constant 0 : index
    %c0_10 = arith.constant 0 : index
    %5 = vector.load %arg6[%c0_9, %c0_10] : memref<32x128xf32, #tpu.memory_space<vmem>>, vector<32x128xf32>
    %c0_11 = arith.constant 0 : index
    %c0_12 = arith.constant 0 : index
    %6 = vector.load %arg7[%c0_11, %c0_12] : memref<1x128xf32, #tpu.memory_space<vmem>>, vector<1x128xf32>
    %cst = arith.constant dense<0.000000e+00> : vector<8x32xf32>
    %7 = tpu.matmul %0, %1, %cst {dimension_numbers = #tpu.dot_dimension_numbers<[1], [0], [0], [1], [0, 0, 1, 1], [], []>} : vector<8x16xf32>, vector<16x32xf32>, vector<8x32xf32> -> vector<8x32xf32>
    %8 = vector.broadcast %2 : vector<1x32xf32> to vector<8x32xf32>
    %9 = arith.addf %7, %8 : vector<8x32xf32>
    %10 = math.tanh %9 : vector<8x32xf32>
    %cst_13 = arith.constant dense<0.000000e+00> : vector<8x32xf32>
    %11 = tpu.matmul %10, %3, %cst_13 {dimension_numbers = #tpu.dot_dimension_numbers<[1], [0], [0], [1], [0, 0, 1, 1], [], []>} : vector<8x32xf32>, vector<32x32xf32>, vector<8x32xf32> -> vector<8x32xf32>
    %12 = vector.broadcast %4 : vector<1x32xf32> to vector<8x32xf32>
    %13 = arith.addf %11, %12 : vector<8x32xf32>
    %14 = math.tanh %13 : vector<8x32xf32>
    %cst_14 = arith.constant dense<0.000000e+00> : vector<8x128xf32>
    %15 = tpu.matmul %14, %5, %cst_14 {dimension_numbers = #tpu.dot_dimension_numbers<[1], [0], [0], [1], [0, 0, 1, 1], [], []>} : vector<8x32xf32>, vector<32x128xf32>, vector<8x128xf32> -> vector<8x128xf32>
    %16 = vector.broadcast %6 : vector<1x128xf32> to vector<8x128xf32>
    %17 = arith.addf %15, %16 : vector<8x128xf32>
    %c0_15 = arith.constant 0 : index
    %c0_16 = arith.constant 0 : index
    %18 = vector.load %arg8[%c0_15, %c0_16] : memref<1x128xf32, #tpu.memory_space<vmem>>, vector<1x128xf32>
    %19 = math.exp %18 : vector<1x128xf32>
    %c0_17 = arith.constant 0 : index
    %c0_18 = arith.constant 0 : index
    %20 = vector.load %arg9[%c0_17, %c0_18] : memref<8x128xf32, #tpu.memory_space<vmem>>, vector<8x128xf32>
    %21 = vector.broadcast %19 : vector<1x128xf32> to vector<8x128xf32>
    %22 = arith.mulf %20, %21 : vector<8x128xf32>
    %23 = arith.addf %17, %22 : vector<8x128xf32>
    %c0_19 = arith.constant 0 : index
    %c0_20 = arith.constant 0 : index
    %24 = vector.load %arg10[%c0_19, %c0_20] : memref<8x256xf32, #tpu.memory_space<vmem>>, vector<8x128xf32>
    tpu.vector_store %arg10[%c0_19, %c0_20], %17 {strides = array<i32>} : memref<8x256xf32, #tpu.memory_space<vmem>>, vector<8x128xf32>,
    %c0_21 = arith.constant 0 : index
    %c128 = arith.constant 128 : index
    %25 = vector.load %arg10[%c0_21, %c128] : memref<8x256xf32, #tpu.memory_space<vmem>>, vector<8x128xf32>
    tpu.vector_store %arg10[%c0_21, %c128], %23 {strides = array<i32>} : memref<8x256xf32, #tpu.memory_space<vmem>>, vector<8x128xf32>,
    return
  }
  func.func @transform_0(%arg0: i32) -> (i32, i32) {
    %c0_i32 = arith.constant 0 : i32
    %c0_i32_0 = arith.constant 0 : i32
    return %arg0, %c0_i32 : i32, i32
  }
  func.func @transform_1(%arg0: i32) -> (i32, i32) {
    %c0_i32 = arith.constant 0 : i32
    %c0_i32_0 = arith.constant 0 : i32
    %c0_i32_1 = arith.constant 0 : i32
    return %c0_i32, %c0_i32_0 : i32, i32
  }
  func.func @transform_2(%arg0: i32) -> (i32, i32) {
    %c0_i32 = arith.constant 0 : i32
    %c0_i32_0 = arith.constant 0 : i32
    %c0_i32_1 = arith.constant 0 : i32
    return %c0_i32, %c0_i32_0 : i32, i32
  }
  func.func @transform_3(%arg0: i32) -> (i32, i32) {
    %c0_i32 = arith.constant 0 : i32
    %c0_i32_0 = arith.constant 0 : i32
    %c0_i32_1 = arith.constant 0 : i32
    return %c0_i32, %c0_i32_0 : i32, i32
  }
  func.func @transform_4(%arg0: i32) -> (i32, i32) {
    %c0_i32 = arith.constant 0 : i32
    %c0_i32_0 = arith.constant 0 : i32
    %c0_i32_1 = arith.constant 0 : i32
    return %c0_i32, %c0_i32_0 : i32, i32
  }
  func.func @transform_5(%arg0: i32) -> (i32, i32) {
    %c0_i32 = arith.constant 0 : i32
    %c0_i32_0 = arith.constant 0 : i32
    %c0_i32_1 = arith.constant 0 : i32
    return %c0_i32, %c0_i32_0 : i32, i32
  }
  func.func @transform_6(%arg0: i32) -> (i32, i32) {
    %c0_i32 = arith.constant 0 : i32
    %c0_i32_0 = arith.constant 0 : i32
    %c0_i32_1 = arith.constant 0 : i32
    return %c0_i32, %c0_i32_0 : i32, i32
  }
  func.func @transform_7(%arg0: i32) -> (i32, i32) {
    %c0_i32 = arith.constant 0 : i32
    %c0_i32_0 = arith.constant 0 : i32
    %c0_i32_1 = arith.constant 0 : i32
    return %c0_i32, %c0_i32_0 : i32, i32
  }
  func.func @transform_8(%arg0: i32) -> (i32, i32) {
    %c0_i32 = arith.constant 0 : i32
    %c0_i32_0 = arith.constant 0 : i32
    return %arg0, %c0_i32 : i32, i32
  }
  func.func @transform_9(%arg0: i32) -> (i32, i32) {
    %c0_i32 = arith.constant 0 : i32
    %c0_i32_0 = arith.constant 0 : i32
    return %arg0, %c0_i32 : i32, i32
  }
}

</mosaic_0001>

<llo_original>
// kernel: tpu_custom_call.1
$region0: #{tpu_custom_call.1}
  #allocation0 [shape = 'u32[]', space=smem, size = 0x4, offset = 0x4, fixed_abs, tag = 'smem constant byte address 0x4 - core index']
  #allocation1 [shape = 'u32[144,128]{1,0:T(1,128)}', space=vmem, size = 0x12000, scoped, tag = 'internal scratch']
  %s0 = inlined_call_operand.hbm [shape: f32[8,16], index: 0, kind: input, shape index: {}]
  %s1 = inlined_call_operand.hbm [shape: f32[16,32], index: 1, kind: input, shape index: {}]
  %s2 = inlined_call_operand.vmem [shape: f32[1,32], index: 2, kind: input, shape index: {}]
  %s3 = inlined_call_operand.hbm [shape: f32[32,32], index: 3, kind: input, shape index: {}]
  %s4 = inlined_call_operand.vmem [shape: f32[1,32], index: 4, kind: input, shape index: {}]
  %s5 = inlined_call_operand.hbm [shape: f32[32,128], index: 5, kind: input, shape index: {}]
  %s6 = inlined_call_operand.vmem [shape: f32[1,128], index: 6, kind: input, shape index: {}]
  %s7 = inlined_call_operand.vmem [shape: f32[1,128], index: 7, kind: input, shape index: {}]
  %s8 = inlined_call_operand.vmem [shape: f32[8,128], index: 8, kind: input, shape index: {}]
  %s9 = inlined_call_operand.hbm [shape: f32[8,256], index: 9, kind: output, shape index: {}]
  %s10 = sld [smem:[#allocation0]]
  $region62: #{tpu_custom_call.1} parent=0
    _
  %s12 = ssub.s32 1, %s10
  %s13 = scalar_select 0, %s12, %s10
  $region1: #{tpu_custom_call.1} parent=0
    #allocation2 [shape = 'u8[4096]{0}', space=vmem, size = 0x1000, scoped, tag = 'input window, operand 0, single buffered']
    #allocation3 [shape = 's32[1]{0}', space=sflag, size = 0x4, scoped, tag = 'scoped memory for tpu_custom_call.1']
    #allocation4 [shape = 's32[1]{0}', space=sflag, size = 0x4, scoped, tag = 'scoped memory for tpu_custom_call.1']
    #allocation5 [shape = 'u8[8192]{0}', space=vmem, size = 0x2000, scoped, tag = 'input window, operand 1, single buffered']
    #allocation6 [shape = 's32[1]{0}', space=sflag, size = 0x4, scoped, tag = 'scoped memory for tpu_custom_call.1']
    #allocation7 [shape = 'u8[16384]{0}', space=vmem, size = 0x4000, scoped, tag = 'input window, operand 3, single buffered']
    #allocation8 [shape = 'u8[16384]{0}', space=vmem, size = 0x4000, scoped, tag = 'input window, operand 5, single buffered']
    #allocation9 [shape = 's32[1]{0}', space=sflag, size = 0x4, scoped, tag = 'scoped memory for tpu_custom_call.1']
    #allocation10 [shape = 'u8[8192]{0}', space=vmem, size = 0x2000, scoped, tag = 'output window, operand 0, single buffered']
    %14 = vsyncpa [#allocation3], 0
    %15 = vsyncpa [#allocation6], 0
    %16 = vsyncpa [#allocation9], 0
    %17 = vsyncpa [#allocation4], 0
    // Predicated region
    $region2: #{tpu_custom_call.1} parent=1 // pred_check
      _
    $region3: #{tpu_custom_call.1} parent=1 // pred_check_branch
      %19 = sbr.rel (0) target = $region5
    $region4: #{tpu_custom_call.1} parent=1 // pred_region
      %s21 = ssub.s32 128, 128
      %22 = vsyncadd [#allocation3], %s21
      %s24 = sshll.u32 [#allocation2], 4
      %s25 = int_to_ptr.vmem [resolvable:$true] %s24
      %27 = dma.hbm_to_vmem [thread:$0]  %s0, 128, %s25, [#allocation3]
    $region5: #{tpu_custom_call.1} parent=1 // pred_fallthru
      _
    // Predicated region
    $region6: #{tpu_custom_call.1} parent=1 // pred_check
      _
    $region7: #{tpu_custom_call.1} parent=1 // pred_check_branch
      %29 = sbr.rel (0) target = $region9
    $region8: #{tpu_custom_call.1} parent=1 // pred_region
      %s31 = ssub.s32 256, 256
      %32 = vsyncadd [#allocation6], %s31
      %s33 = sshll.u32 [#allocation5], 4
      %s34 = int_to_ptr.vmem [resolvable:$true] %s33
      %39 = dma.hbm_to_vmem [thread:$0]  %s1, 256, %s34, [#allocation6], 128, 128, 8
    $region9: #{tpu_custom_call.1} parent=1 // pred_fallthru
      _
    // Predicated region
    $region10: #{tpu_custom_call.1} parent=1 // pred_check
      _
    $region11: #{tpu_custom_call.1} parent=1 // pred_check_branch
      %41 = sbr.rel (0) target = $region13
    $region12: #{tpu_custom_call.1} parent=1 // pred_region
      _
    $region13: #{tpu_custom_call.1} parent=1 // pred_fallthru
      _
    // Predicated region
    $region14: #{tpu_custom_call.1} parent=1 // pred_check
      _
    $region15: #{tpu_custom_call.1} parent=1 // pred_check_branch
      %43 = sbr.rel (0) target = $region17
    $region16: #{tpu_custom_call.1} parent=1 // pred_region
      %s45 = ssub.s32 512, 512
      %46 = vsyncadd [#allocation6], %s45
      %s47 = sshll.u32 [#allocation7], 4
      %s48 = int_to_ptr.vmem [resolvable:$true] %s47
      %53 = dma.hbm_to_vmem [thread:$0]  %s3, 512, %s48, [#allocation6], 128, 128, 8
    $region17: #{tpu_custom_call.1} parent=1 // pred_fallthru
      _
    // Predicated region
    $region18: #{tpu_custom_call.1} parent=1 // pred_check
      _
    $region19: #{tpu_custom_call.1} parent=1 // pred_check_branch
      %55 = sbr.rel (0) target = $region21
    $region20: #{tpu_custom_call.1} parent=1 // pred_region
      _
    $region21: #{tpu_custom_call.1} parent=1 // pred_fallthru
      _
    // Predicated region
    $region22: #{tpu_custom_call.1} parent=1 // pred_check
      _
    $region23: #{tpu_custom_call.1} parent=1 // pred_check_branch
      %57 = sbr.rel (0) target = $region25
    $region24: #{tpu_custom_call.1} parent=1 // pred_region
      %s59 = ssub.s32 512, 512
      %60 = vsyncadd [#allocation9], %s59
      %s61 = sshll.u32 [#allocation8], 4
      %s62 = int_to_ptr.vmem [resolvable:$true] %s61
      %67 = dma.hbm_to_vmem [thread:$0]  %s5, 512, %s62, [#allocation9], 128, 128, 8
    $region25: #{tpu_custom_call.1} parent=1 // pred_fallthru
      _
    // Predicated region
    $region26: #{tpu_custom_call.1} parent=1 // pred_check
      _
    $region27: #{tpu_custom_call.1} parent=1 // pred_check_branch
      %69 = sbr.rel (0) target = $region29
    $region28: #{tpu_custom_call.1} parent=1 // pred_region
      _
    $region29: #{tpu_custom_call.1} parent=1 // pred_fallthru
      _
    // Predicated region
    $region30: #{tpu_custom_call.1} parent=1 // pred_check
      _
    $region31: #{tpu_custom_call.1} parent=1 // pred_check_branch
      %71 = sbr.rel (0) target = $region33
    $region32: #{tpu_custom_call.1} parent=1 // pred_region
      _
    $region33: #{tpu_custom_call.1} parent=1 // pred_fallthru
      _
    // Predicated region
    $region34: #{tpu_custom_call.1} parent=1 // pred_check
      _
    $region35: #{tpu_custom_call.1} parent=1 // pred_check_branch
      %73 = sbr.rel (0) target = $region37
    $region36: #{tpu_custom_call.1} parent=1 // pred_region
      _
    $region37: #{tpu_custom_call.1} parent=1 // pred_fallthru
      _
    // Predicated region
    $region38: #{tpu_custom_call.1} parent=1 // pred_check
      _
    $region39: #{tpu_custom_call.1} parent=1 // pred_check_branch
      %75 = sbr.rel (0) target = $region41
    $region40: #{tpu_custom_call.1} parent=1 // pred_region
      %76 = dma.done [#allocation3], 128
    $region41: #{tpu_custom_call.1} parent=1 // pred_fallthru
      _
    // Predicated region
    $region42: #{tpu_custom_call.1} parent=1 // pred_check
      _
    $region43: #{tpu_custom_call.1} parent=1 // pred_check_branch
      %78 = sbr.rel (0) target = $region45
    $region44: #{tpu_custom_call.1} parent=1 // pred_region
      %79 = dma.done [#allocation6], 256
    $region45: #{tpu_custom_call.1} parent=1 // pred_fallthru
      _
    // Predicated region
    $region46: #{tpu_custom_call.1} parent=1 // pred_check
      _
    $region47: #{tpu_custom_call.1} parent=1 // pred_check_branch
      %81 = sbr.rel (0) target = $region49
    $region48: #{tpu_custom_call.1} parent=1 // pred_region
      %82 = dma.done [#allocation6], 512
    $region49: #{tpu_custom_call.1} parent=1 // pred_fallthru
      _
    // Predicated region
    $region50: #{tpu_custom_call.1} parent=1 // pred_check
      _
    $region51: #{tpu_custom_call.1} parent=1 // pred_check_branch
      %84 = sbr.rel (0) target = $region53
    $region52: #{tpu_custom_call.1} parent=1 // pred_region
      %85 = dma.done [#allocation9], 512
    $region53: #{tpu_custom_call.1} parent=1 // pred_fallthru
      _
    %v86 = vld [vmem:[#allocation2] sm:$0xff]
    %v87 = vld [vmem:[#allocation5] sm:$0xff]
    %v88 = vld [vmem:[#allocation5 + $0x8] sm:$0xff]
    %v89 = vld [vmem:[%s2] sm:$0x1]
    %v90 = vld [vmem:[#allocation7] sm:$0xff]
    %v91 = vld [vmem:[#allocation7 + $0x8] sm:$0xff]
    %v92 = vld [vmem:[#allocation7 + $0x10] sm:$0xff]
    %v93 = vld [vmem:[#allocation7 + $0x18] sm:$0xff]
    %v94 = vld [vmem:[%s4] sm:$0x1]
    %v95 = vld [vmem:[#allocation8] sm:$0xff]
    %v96 = vld [vmem:[#allocation8 + $0x8] sm:$0xff]
    %v97 = vld [vmem:[#allocation8 + $0x10] sm:$0xff]
    %v98 = vld [vmem:[#allocation8 + $0x18] sm:$0xff]
    %v99 = vld [vmem:[%s6] sm:$0x1]
    %v101 = vlaneseq
    %v102 = vshrl.u32 %v101, 7
    %v103 = vsub.s32 0, %v102
    %v104 = vrot.slane %v89, %v103
    %vm106 = vcmask 130048
    %v108 = vsel %vm106, %v86, 0
    %110 = vmatprep.subr.mxu0 0.0
    %111 = vmatpush1.msra.mxu0 %v87
    %112 = vmatprep.subr.mxu0 0.0
    %113 = vmatpush1.msra.mxu0 %v88
    %114 = vmatprep.subr.mxu0 0.0
    %115 = vmatpush1.msra.mxu0 0.0
    %116 = vmatprep.subr.mxu0 0.0
    %117 = vmatpush1.msra.mxu0 0.0
    %118 = vmatprep.subr.mxu0 0.0
    %119 = vmatpush1.msra.mxu0 0.0
    %120 = vmatprep.subr.mxu0 0.0
    %121 = vmatpush1.msra.mxu0 0.0
    %122 = vmatprep.subr.mxu0 0.0
    %123 = vmatpush1.msra.mxu0 0.0
    %124 = vmatprep.subr.mxu0 0.0
    %125 = vmatpush1.msra.mxu0 0.0
    %126 = vmatprep.subr.mxu0 0.0
    %127 = vmatpush1.msra.mxu0 0.0
    %128 = vmatprep.subr.mxu0 0.0
    %129 = vmatpush1.msra.mxu0 0.0
    %130 = vmatprep.subr.mxu0 0.0
    %131 = vmatpush1.msra.mxu0 0.0
    %132 = vmatprep.subr.mxu0 0.0
    %133 = vmatpush1.msra.mxu0 0.0
    %134 = vmatprep.subr.mxu0 0.0
    %135 = vmatpush1.msra.mxu0 0.0
    %136 = vmatprep.subr.mxu0 0.0
    %137 = vmatpush1.msra.mxu0 0.0
    %138 = vmatprep.subr.mxu0 0.0
    %139 = vmatpush1.msra.mxu0 0.0
    %140 = vmatprep.subr.mxu0 0.0
    %141 = vmatpush1.msra.mxu0 0.0
    %142 = vmatprep.subr.mxu0 0.0
    %143 = vmatpush1.msra.mxu0 0.0
    %144 = vmatprep.subr.mxu0 0.0
    %145 = vmatpush1.msra.mxu0 0.0
    %146 = vmatprep.subr.mxu0 0.0
    %147 = vmatpush1.msra.mxu0 0.0
    %148 = vmatprep.subr.mxu0 0.0
    %149 = vmatpush1.msra.mxu0 0.0
    %150 = vmatprep.subr.mxu0 0.0
    %151 = vmatpush1.msra.mxu0 0.0
    %152 = vmatprep.subr.mxu0 0.0
    %153 = vmatpush1.msra.mxu0 0.0
    %154 = vmatprep.subr.mxu0 0.0
    %155 = vmatpush1.msra.mxu0 0.0
    %156 = vmatprep.subr.mxu0 0.0
    %157 = vmatpush1.msra.mxu0 0.0
    %158 = vmatprep.subr.mxu0 0.0
    %159 = vmatpush1.msra.mxu0 0.0
    %160 = vmatprep.subr.mxu0 0.0
    %161 = vmatpush1.msra.mxu0 0.0
    %162 = vmatprep.subr.mxu0 0.0
    %163 = vmatpush1.msra.mxu0 0.0
    %164 = vmatprep.subr.mxu0 0.0
    %165 = vmatpush1.msra.mxu0 0.0
    %166 = vmatprep.subr.mxu0 0.0
    %167 = vmatpush1.msra.mxu0 0.0
    %168 = vmatprep.subr.mxu0 0.0
    %169 = vmatpush1.msra.mxu0 0.0
    %170 = vmatprep.subr.mxu0 0.0
    %171 = vmatpush1.msra.mxu0 0.0
    %172 = vmatprep.subr.mxu0 0.0
    %173 = vmatpush1.msra.mxu0 0.0
    %174 = vmatprep.mubr.f32.mxu0 0.0
    %175 = vmatmul.mubr.f32.gmra.mrb[0].mxu0 %v108
    %v176 = vpop.f32.mrb[0].mxu0
    %v177 = vadd.f32 %v104, %v176
    %v178 = vpop.f32.mrb[0].mxu0
    %179 = vdwg.mxu0
    %v180 = vtanh.pop %v177
    %v182 = vlaneseq
    %v183 = vshrl.u32 %v182, 7
    %v184 = vsub.s32 0, %v183
    %v185 = vrot.slane %v94, %v184
    %vm187 = vcmask 261120
    %v189 = vsel %vm187, %v180, 0
    %191 = vmatprep.subr.mxu0 0.0
    %192 = vmatpush1.msra.mxu0 %v90
    %193 = vmatprep.subr.mxu0 0.0
    %194 = vmatpush1.msra.mxu0 %v91
    %195 = vmatprep.subr.mxu0 0.0
    %196 = vmatpush1.msra.mxu0 %v92
    %197 = vmatprep.subr.mxu0 0.0
    %198 = vmatpush1.msra.mxu0 %v93
    %199 = vmatprep.subr.mxu0 0.0
    %200 = vmatpush1.msra.mxu0 0.0
    %201 = vmatprep.subr.mxu0 0.0
    %202 = vmatpush1.msra.mxu0 0.0
    %203 = vmatprep.subr.mxu0 0.0
    %204 = vmatpush1.msra.mxu0 0.0
    %205 = vmatprep.subr.mxu0 0.0
    %206 = vmatpush1.msra.mxu0 0.0
    %207 = vmatprep.subr.mxu0 0.0
    %208 = vmatpush1.msra.mxu0 0.0
    %209 = vmatprep.subr.mxu0 0.0
    %210 = vmatpush1.msra.mxu0 0.0
    %211 = vmatprep.subr.mxu0 0.0
    %212 = vmatpush1.msra.mxu0 0.0
    %213 = vmatprep.subr.mxu0 0.0
    %214 = vmatpush1.msra.mxu0 0.0
    %215 = vmatprep.subr.mxu0 0.0
    %216 = vmatpush1.msra.mxu0 0.0
    %217 = vmatprep.subr.mxu0 0.0
    %218 = vmatpush1.msra.mxu0 0.0
    %219 = vmatprep.subr.mxu0 0.0
    %220 = vmatpush1.msra.mxu0 0.0
    %221 = vmatprep.subr.mxu0 0.0
    %222 = vmatpush1.msra.mxu0 0.0
    %223 = vmatprep.subr.mxu0 0.0
    %224 = vmatpush1.msra.mxu0 0.0
    %225 = vmatprep.subr.mxu0 0.0
    %226 = vmatpush1.msra.mxu0 0.0
    %227 = vmatprep.subr.mxu0 0.0
    %228 = vmatpush1.msra.mxu0 0.0
    %229 = vmatprep.subr.mxu0 0.0
    %230 = vmatpush1.msra.mxu0 0.0
    %231 = vmatprep.subr.mxu0 0.0
    %232 = vmatpush1.msra.mxu0 0.0
    %233 = vmatprep.subr.mxu0 0.0
    %234 = vmatpush1.msra.mxu0 0.0
    %235 = vmatprep.subr.mxu0 0.0
    %236 = vmatpush1.msra.mxu0 0.0
    %237 = vmatprep.subr.mxu0 0.0
    %238 = vmatpush1.msra.mxu0 0.0
    %239 = vmatprep.subr.mxu0 0.0
    %240 = vmatpush1.msra.mxu0 0.0
    %241 = vmatprep.subr.mxu0 0.0
    %242 = vmatpush1.msra.mxu0 0.0
    %243 = vmatprep.subr.mxu0 0.0
    %244 = vmatpush1.msra.mxu0 0.0
    %245 = vmatprep.subr.mxu0 0.0
    %246 = vmatpush1.msra.mxu0 0.0
    %247 = vmatprep.subr.mxu0 0.0
    %248 = vmatpush1.msra.mxu0 0.0
    %249 = vmatprep.subr.mxu0 0.0
    %250 = vmatpush1.msra.mxu0 0.0
    %251 = vmatprep.subr.mxu0 0.0
    %252 = vmatpush1.msra.mxu0 0.0
    %253 = vmatprep.subr.mxu0 0.0
    %254 = vmatpush1.msra.mxu0 0.0
    %255 = vmatprep.mubr.f32.mxu0 0.0
    %256 = vmatmul.mubr.f32.gmra.mrb[0].mxu0 %v189
    %v257 = vpop.f32.mrb[0].mxu0
    %v258 = vadd.f32 %v185, %v257
    %v259 = vpop.f32.mrb[0].mxu0
    %260 = vdwg.mxu0
    %v261 = vtanh.pop %v258
    %v263 = vlaneseq
    %v264 = vshrl.u32 %v263, 7
    %v265 = vsub.s32 0, %v264
    %v266 = vrot.slane %v99, %v265
    %v269 = vsel %vm187, %v261, 0
    %271 = vmatprep.subr.mxu0 0.0
    %272 = vmatpush1.msra.mxu0 %v95
    %273 = vmatprep.subr.mxu0 0.0
    %274 = vmatpush1.msra.mxu0 %v96
    %275 = vmatprep.subr.mxu0 0.0
    %276 = vmatpush1.msra.mxu0 %v97
    %277 = vmatprep.subr.mxu0 0.0
    %278 = vmatpush1.msra.mxu0 %v98
    %279 = vmatprep.subr.mxu0 0.0
    %280 = vmatpush1.msra.mxu0 0.0
    %281 = vmatprep.subr.mxu0 0.0
    %282 = vmatpush1.msra.mxu0 0.0
    %283 = vmatprep.subr.mxu0 0.0
    %284 = vmatpush1.msra.mxu0 0.0
    %285 = vmatprep.subr.mxu0 0.0
    %286 = vmatpush1.msra.mxu0 0.0
    %287 = vmatprep.subr.mxu0 0.0
    %288 = vmatpush1.msra.mxu0 0.0
    %289 = vmatprep.subr.mxu0 0.0
    %290 = vmatpush1.msra.mxu0 0.0
    %291 = vmatprep.subr.mxu0 0.0
    %292 = vmatpush1.msra.mxu0 0.0
    %293 = vmatprep.subr.mxu0 0.0
    %294 = vmatpush1.msra.mxu0 0.0
    %295 = vmatprep.subr.mxu0 0.0
    %296 = vmatpush1.msra.mxu0 0.0
    %297 = vmatprep.subr.mxu0 0.0
    %298 = vmatpush1.msra.mxu0 0.0
    %299 = vmatprep.subr.mxu0 0.0
    %300 = vmatpush1.msra.mxu0 0.0
    %301 = vmatprep.subr.mxu0 0.0
    %302 = vmatpush1.msra.mxu0 0.0
    %303 = vmatprep.subr.mxu0 0.0
    %304 = vmatpush1.msra.mxu0 0.0
    %305 = vmatprep.subr.mxu0 0.0
    %306 = vmatpush1.msra.mxu0 0.0
    %307 = vmatprep.subr.mxu0 0.0
    %308 = vmatpush1.msra.mxu0 0.0
    %309 = vmatprep.subr.mxu0 0.0
    %310 = vmatpush1.msra.mxu0 0.0
    %311 = vmatprep.subr.mxu0 0.0
    %312 = vmatpush1.msra.mxu0 0.0
    %313 = vmatprep.subr.mxu0 0.0
    %314 = vmatpush1.msra.mxu0 0.0
    %315 = vmatprep.subr.mxu0 0.0
    %316 = vmatpush1.msra.mxu0 0.0
    %317 = vmatprep.subr.mxu0 0.0
    %318 = vmatpush1.msra.mxu0 0.0
    %319 = vmatprep.subr.mxu0 0.0
    %320 = vmatpush1.msra.mxu0 0.0
    %321 = vmatprep.subr.mxu0 0.0
    %322 = vmatpush1.msra.mxu0 0.0
    %323 = vmatprep.subr.mxu0 0.0
    %324 = vmatpush1.msra.mxu0 0.0
    %325 = vmatprep.subr.mxu0 0.0
    %326 = vmatpush1.msra.mxu0 0.0
    %327 = vmatprep.subr.mxu0 0.0
    %328 = vmatpush1.msra.mxu0 0.0
    %329 = vmatprep.subr.mxu0 0.0
    %330 = vmatpush1.msra.mxu0 0.0
    %331 = vmatprep.subr.mxu0 0.0
    %332 = vmatpush1.msra.mxu0 0.0
    %333 = vmatprep.subr.mxu0 0.0
    %334 = vmatpush1.msra.mxu0 0.0
    %335 = vmatprep.mubr.f32.mxu0 0.0
    %336 = vmatmul.mubr.f32.gmra.mrb[0].mxu0 %v269
    %v337 = vpop.f32.mrb[0].mxu0
    %v338 = vadd.f32 %v266, %v337
    %v339 = vpop.f32.mrb[0].mxu0
    %340 = vdwg.mxu0
    %v341 = vld [vmem:[%s7] sm:$0x1]
    %v342 = vmul.f32 %v341, 1.442695
    %v343 = vpow.pop %v342
    %v344 = vld [vmem:[%s8] sm:$0xff]
    %v346 = vlaneseq
    %v347 = vshrl.u32 %v346, 7
    %v348 = vsub.s32 0, %v347
    %v349 = vrot.slane %v343, %v348
    %v351 = vmul.f32 %v344, %v349
    %v352 = vadd.f32 %v338, %v351
    %353 = vst [vmem:[#allocation10] sm:$0xff] %v338
    %354 = vst [vmem:[#allocation10 + $0x8] sm:$0xff] %v352
    // Predicated region
    $region54: #{tpu_custom_call.1} parent=1 // pred_check
      _
    $region55: #{tpu_custom_call.1} parent=1 // pred_check_branch
      %356 = sbr.rel (0) target = $region57
    $region56: #{tpu_custom_call.1} parent=1 // pred_region
      %s358 = ssub.s32 256, 256
      %359 = vsyncadd [#allocation4], %s358
      %s361 = sshll.u32 [#allocation10], 4
      %s362 = int_to_ptr.vmem [resolvable:$true] %s361
      %364 = dma.vmem_to_hbm [thread:$0]  %s362, 256, %s9, [#allocation4]
    $region57: #{tpu_custom_call.1} parent=1 // pred_fallthru
      _
    // Predicated region
    $region58: #{tpu_custom_call.1} parent=1 // pred_check
      _
    $region59: #{tpu_custom_call.1} parent=1 // pred_check_branch
      %366 = sbr.rel (0) target = $region61
    $region60: #{tpu_custom_call.1} parent=1 // pred_region
      %367 = dma.done [#allocation4], 256
    $region61: #{tpu_custom_call.1} parent=1 // pred_fallthru
      _
    %368 = vsyncpa [#allocation3], 1
    %369 = vsyncpa [#allocation6], 1
    %370 = vsyncpa [#allocation9], 1
    %371 = vsyncpa [#allocation4], 1

</llo_original>
